<compile_context>
chip_gen: v5e
topology: v5e:2x2
jax: 0.10.0
libtpu: 0.0.40
codegen_flags: <defaults>
</compile_context>

<pallas_src>
import jax
import jax.numpy as jnp
from jax.experimental import pallas as pl
from jax.experimental.pallas import tpu as pltpu


def _copy_kernel(x_ref, o_ref):
    # Pure copy of the current (block_rows, lanes) tile.
    o_ref[...] = x_ref[...]


_LANE_CANDIDATES = (4096, 2048, 1024, 512, 256, 128)


def _lane_dense_2d_shape(shape):
    """Pick a (rows, lanes) factorization with lanes a large multiple of 128."""
    total = 1
    for d in shape:
        total *= d
    for lanes in _LANE_CANDIDATES:
        if total % lanes == 0:
            return total // lanes, lanes
    # Fallback for awkward sizes: keep W as the lane dim (a block whose last
    # dim equals the full array dim is always legal, even if < 128).
    n, c, h, w = shape
    return n * c * h, w


def _pick_block_rows(rows, lanes, itemsize, budget_bytes):
    """Largest row-block fitting the per-buffer VMEM budget.

    Returns either the full row extent (always a legal block dim) or a
    multiple of the dtype's sublane count; Pallas masks the final partial
    block if the choice does not evenly divide `rows`.
    """
    sublane = 8 * max(1, 4 // itemsize)      # 8 (f32/i32), 16 (bf16), 32 (i8)
    target = budget_bytes // max(1, lanes * itemsize)
    target = max(sublane, (target // sublane) * sublane)
    if rows <= target:
        return rows
    return target


def convert_to_caps(x, *, block_budget_bytes=2 * 1024 * 1024):
    """x: (N, C, H, W) -> (N, C, 1, H, W), same dtype, values unchanged."""
    N, C, H, W = x.shape
    rows, lanes = _lane_dense_2d_shape((N, C, H, W))
    x2d = x.reshape(rows, lanes)

    itemsize = jnp.dtype(x.dtype).itemsize
    br = _pick_block_rows(rows, lanes, itemsize, block_budget_bytes)
    grid = (pl.cdiv(rows, br),)

    out2d = pl.pallas_call(
        _copy_kernel,
        out_shape=jax.ShapeDtypeStruct((rows, lanes), x.dtype),
        grid=grid,
        in_specs=[pl.BlockSpec((br, lanes), lambda i: (i, 0))],
        out_specs=pl.BlockSpec((br, lanes), lambda i: (i, 0)),
        compiler_params=pltpu.CompilerParams(
            dimension_semantics=("parallel",),
        ),
    )(x2d)

    # Glue: the unsqueeze(2) itself is a free metadata reshape.
    return out2d.reshape(N, C, 1, H, W)


def _check(x, **kwargs):
    y_ref = jnp.expand_dims(x, 2)   # reference computed before the kernel call
    y = convert_to_caps(x, **kwargs)
    jax.block_until_ready(y)
    assert y.shape == y_ref.shape, (y.shape, y_ref.shape)
    assert y.dtype == x.dtype
    assert jnp.array_equal(y, y_ref)


if __name__ == "__main__":
    key = jax.random.PRNGKey(0)

    # Primary test shape (matches the module's conv-layer output scale).
    N, C, H, W = 2, 4, 16, 16
    x = jax.random.normal(key, (N, C, H, W), dtype=jnp.float32)
    _check(x)

    # Multi-block path: 131072 elems -> (32, 4096) slab; a small budget forces
    # 16-row blocks and a 2-step "parallel" grid.
    x2 = jax.random.normal(jax.random.PRNGKey(0), (4, 32, 32, 32), dtype=jnp.float32)
    _check(x2, block_budget_bytes=256 * 1024)

    # Awkward-size fallback path (element count not a multiple of 128).
    x3 = jax.random.normal(jax.random.PRNGKey(0), (2, 3, 5, 7), dtype=jnp.float32)
    _check(x3)

    print("KERNEL_OK")
</pallas_src>

<mosaic_0001>
module attributes {stable_mosaic.version = 11 : i64} {
  func.func @_copy_kernel(%arg0: i32, %arg1: memref<1x2048xf32, #tpu.memory_space<vmem>>, %arg2: memref<1x2048xf32, #tpu.memory_space<vmem>>) attributes {dimension_semantics = [#tpu.dimension_semantics<parallel>], iteration_bounds = array<i64: 1>, scalar_prefetch = 0 : i64, scratch_operands = 0 : i64, tpu.core_type = #tpu.core_type<tc>, window_params = [{transform_indices = @transform_0, window_bounds = array<i64: 1, 2048>}, {transform_indices = @transform_1, window_bounds = array<i64: 1, 2048>}]} {
    %c0 = arith.constant 0 : index
    %c0_0 = arith.constant 0 : index
    %0 = vector.load %arg1[%c0, %c0_0] : memref<1x2048xf32, #tpu.memory_space<vmem>>, vector<1x2048xf32>
    %c0_1 = arith.constant 0 : index
    %c0_2 = arith.constant 0 : index
    %1 = vector.load %arg2[%c0_1, %c0_2] : memref<1x2048xf32, #tpu.memory_space<vmem>>, vector<1x2048xf32>
    tpu.vector_store %arg2[%c0_1, %c0_2], %0 {strides = array<i32>} : memref<1x2048xf32, #tpu.memory_space<vmem>>, vector<1x2048xf32>,
    return
  }
  func.func @transform_0(%arg0: i32) -> (i32, i32) {
    %c0_i32 = arith.constant 0 : i32
    %c0_i32_0 = arith.constant 0 : i32
    return %arg0, %c0_i32 : i32, i32
  }
  func.func @transform_1(%arg0: i32) -> (i32, i32) {
    %c0_i32 = arith.constant 0 : i32
    %c0_i32_0 = arith.constant 0 : i32
    return %arg0, %c0_i32 : i32, i32
  }
}

</mosaic_0001>

<llo_original>
// kernel: tpu_custom_call.1
$region0: #{tpu_custom_call.1}
  #allocation0 [shape = 'u32[]', space=smem, size = 0x4, offset = 0x4, fixed_abs, tag = 'smem constant byte address 0x4 - core index']
  #allocation1 [shape = 'u32[72,128]{1,0:T(1,128)}', space=vmem, size = 0x9000, scoped, tag = 'internal scratch']
  %s0 = inlined_call_operand.hbm [shape: f32[1,2048], index: 0, kind: input, shape index: {}]
  %s1 = inlined_call_operand.hbm [shape: f32[1,2048], index: 1, kind: output, shape index: {}]
  %s2 = sld [smem:[#allocation0]]
  $region18: #{tpu_custom_call.1} parent=0
    _
  %s4 = ssub.s32 1, %s2
  %s5 = scalar_select 0, %s4, %s2
  $region1: #{tpu_custom_call.1} parent=0
    #allocation2 [shape = 'u8[8192]{0}', space=vmem, size = 0x2000, scoped, tag = 'input window, operand 0, single buffered']
    #allocation3 [shape = 's32[1]{0}', space=sflag, size = 0x4, scoped, tag = 'scoped memory for tpu_custom_call.1']
    #allocation4 [shape = 's32[1]{0}', space=sflag, size = 0x4, scoped, tag = 'scoped memory for tpu_custom_call.1']
    #allocation5 [shape = 'u8[8192]{0}', space=vmem, size = 0x2000, scoped, tag = 'output window, operand 0, single buffered']
    %6 = vsyncpa [#allocation3], 0
    %7 = vsyncpa [#allocation4], 0
    // Predicated region
    $region2: #{tpu_custom_call.1} parent=1 // pred_check
      _
    $region3: #{tpu_custom_call.1} parent=1 // pred_check_branch
      %9 = sbr.rel (0) target = $region5
    $region4: #{tpu_custom_call.1} parent=1 // pred_region
      %11 = vsyncadd [#allocation3], 0
      %s13 = sshll.u32 %s0, 4
      %s14 = int_to_ptr.hbm [resolvable:$true] %s13
      %s15 = sshll.u32 [#allocation2], 4
      %s16 = int_to_ptr.vmem [resolvable:$true] %s15
      %18 = dma.hbm_to_vmem [thread:$0]  %s14, 256, %s16, [#allocation3]
    $region5: #{tpu_custom_call.1} parent=1 // pred_fallthru
      _
    // Predicated region
    $region6: #{tpu_custom_call.1} parent=1 // pred_check
      _
    $region7: #{tpu_custom_call.1} parent=1 // pred_check_branch
      %20 = sbr.rel (0) target = $region9
    $region8: #{tpu_custom_call.1} parent=1 // pred_region
      %22 = dma.done [#allocation3], 256
    $region9: #{tpu_custom_call.1} parent=1 // pred_fallthru
      _
    %v23 = vld [vmem:[#allocation2] sm:$0xff]
    %v24 = vld [vmem:[#allocation2 + $0x8] sm:$0xff]
    %25 = vst [vmem:[#allocation5] sm:$0xff] %v23
    %26 = vst [vmem:[#allocation5 + $0x8] sm:$0xff] %v24
    // Predicated region
    $region10: #{tpu_custom_call.1} parent=1 // pred_check
      _
    $region11: #{tpu_custom_call.1} parent=1 // pred_check_branch
      %28 = sbr.rel (0) target = $region13
    $region12: #{tpu_custom_call.1} parent=1 // pred_region
      %30 = vsyncadd [#allocation4], 0
      %s32 = sshll.u32 [#allocation5], 4
      %s33 = int_to_ptr.vmem [resolvable:$true] %s32
      %s34 = sshll.u32 %s1, 4
      %s35 = int_to_ptr.hbm [resolvable:$true] %s34
      %37 = dma.vmem_to_hbm [thread:$0]  %s33, 256, %s35, [#allocation4]
    $region13: #{tpu_custom_call.1} parent=1 // pred_fallthru
      _
    // Predicated region
    $region14: #{tpu_custom_call.1} parent=1 // pred_check
      _
    $region15: #{tpu_custom_call.1} parent=1 // pred_check_branch
      %39 = sbr.rel (0) target = $region17
    $region16: #{tpu_custom_call.1} parent=1 // pred_region
      %41 = dma.done [#allocation4], 256
    $region17: #{tpu_custom_call.1} parent=1 // pred_fallthru
      _
    %42 = vsyncpa [#allocation3], 1
    %43 = vsyncpa [#allocation4], 1

</llo_original>
